<compile_context>
chip_gen: v5e
topology: v5e:2x2
jax: 0.10.0
libtpu: 0.0.40
codegen_flags: <defaults>
</compile_context>

<pallas_src>
import jax
import jax.numpy as jnp
from jax.experimental import pallas as pl
from jax.experimental.pallas import tpu as pltpu

LN_EPS = 1e-5


def _round_up(n, m):
    return ((n + m - 1) // m) * m


def midfc_kernel(x_ref, w_ref, b_ref, o_ref):
    """One batch tile of MidFC: L x (Linear -> LayerNorm(no affine) -> ReLU).

    x_ref : (TB, D)     f32 activation tile
    w_ref : (L, D, D)   bf16 packed layer weights ([in, out] = torch W.T)
    b_ref : (L, 1, D)   f32 packed layer biases
    o_ref : (TB, D)     f32 output tile
    """
    h = x_ref[...]
    num_layers = w_ref.shape[0]
    inv_d = 1.0 / w_ref.shape[-1]

    # Static Python loop: num_layers is small and known at trace time, so the
    # whole chain unrolls and the LLO scheduler sees it end-to-end.
    for layer in range(num_layers):
        # bf16 MXU operands, f32 accumulation.
        y = jnp.dot(h.astype(jnp.bfloat16), w_ref[layer],
                    preferred_element_type=jnp.float32)
        y = y + b_ref[layer]

        # LayerNorm (elementwise_affine=False) via E[y^2] - mean^2: both
        # reductions read the same y buffer; normalization is one fused
        # per-element multiply-add.
        mean = jnp.sum(y, axis=-1, keepdims=True) * inv_d
        mean_sq = jnp.sum(y * y, axis=-1, keepdims=True) * inv_d
        var = mean_sq - mean * mean
        inv = jax.lax.rsqrt(var + LN_EPS)            # EUP slot
        # ReLU; Dropout is the identity in eval mode.
        h = jnp.maximum(y * inv - mean * inv, 0.0)

    o_ref[...] = h


def _vmem_limit_bytes(num_layers, d, tb, slab_buffers):
    w_bytes = slab_buffers * num_layers * d * d * 2     # bf16 weight slab
    b_bytes = slab_buffers * num_layers * d * 4         # f32 bias slab
    act_bytes = 2 * 2 * tb * d * 4                      # in+out tiles, 2-buffered
    est = w_bytes + b_bytes + act_bytes
    # 2x headroom for compiler scratch; 56 MiB cap keeps it legal on v7x.
    return int(min(max(2 * est, 32 << 20), 56 << 20))


def midfc(x, weights, biases, *, block_b=512):
    """Fused MidFC forward.

    x:       (B, D)     f32
    weights: (L, D, D)  layer l weight stored as [in, out] (= torch W.T)
    biases:  (L, 1, D)  f32
    """
    B, D = x.shape
    L = weights.shape[0]
    assert weights.shape == (L, D, D) and biases.shape == (L, 1, D)

    # Batch tile: as large as requested, a multiple of 8 sublanes, never
    # larger than the (padded) batch. Pad the batch so tiles are always full.
    tb = _round_up(min(block_b, _round_up(B, 8)), 8)
    Bp = _round_up(B, tb)
    xp = jnp.pad(x, ((0, Bp - B), (0, 0))) if Bp != B else x

    w_bf16 = weights.astype(jnp.bfloat16)   # halve weight HBM/VMEM bytes
    b_f32 = biases.astype(jnp.float32)
    grid = (Bp // tb,)

    def build(single_buffer_slabs):
        slab_kwargs = (
            dict(pipeline_mode=pl.Buffered(1)) if single_buffer_slabs else {}
        )
        return pl.pallas_call(
            midfc_kernel,
            out_shape=jax.ShapeDtypeStruct((Bp, D), jnp.float32),
            grid_spec=pltpu.PrefetchScalarGridSpec(
                num_scalar_prefetch=0,
                grid=grid,
                in_specs=[
                    # activation tile streams over the batch grid axis
                    pl.BlockSpec((tb, D), lambda i: (i, 0)),
                    # packed weight / bias slabs: grid-invariant => resident
                    pl.BlockSpec((L, D, D), lambda i: (0, 0, 0), **slab_kwargs),
                    pl.BlockSpec((L, 1, D), lambda i: (0, 0, 0), **slab_kwargs),
                ],
                out_specs=pl.BlockSpec((tb, D), lambda i: (i, 0)),
            ),
            compiler_params=pltpu.CompilerParams(
                dimension_semantics=("parallel",),   # both TCs on v7x
                vmem_limit_bytes=_vmem_limit_bytes(
                    L, D, tb, 1 if single_buffer_slabs else 2),
            ),
        )

    # TODO(synk): if L*D*D*2 bytes stops fitting VMEM (v7x: 64 MiB), switch to a
    # second "arbitrary" grid axis over layers that streams one (1, D, D) weight
    # block per step with the activation held in a VMEM scratch accumulator.
    try:
        out = build(True)(xp, w_bf16, b_f32)
    except Exception:
        # Fallback for JAX builds without BlockSpec pipeline_mode support.
        out = build(False)(xp, w_bf16, b_f32)

    return out[:B] if Bp != B else out


def _reference_midfc(x, weights, biases):
    """Plain-JAX f32 reference (same math as the PyTorch module in eval mode)."""
    h = x
    for layer in range(weights.shape[0]):
        y = h @ weights[layer] + biases[layer]
        mean = jnp.mean(y, axis=-1, keepdims=True)
        var = jnp.mean((y - mean) ** 2, axis=-1, keepdims=True)
        h = jnp.maximum((y - mean) / jnp.sqrt(var + LN_EPS), 0.0)
    return h


if __name__ == "__main__":
    key = jax.random.PRNGKey(0)
    k_x, k_w, k_b, k_x2 = jax.random.split(key, 4)

    # Small, lane-dense shapes: dim = 128 (one full lane row), 3 MLP layers.
    B, D, L = 8, 128, 3
    x = jax.random.normal(k_x, (B, D), jnp.float32)
    weights = jax.random.normal(k_w, (L, D, D), jnp.float32) * 0.05
    biases = jax.random.normal(k_b, (L, 1, D), jnp.float32) * 0.05

    out = midfc(x, weights, biases)
    jax.block_until_ready(out)
    ref = _reference_midfc(x, weights, biases)

    assert out.shape == (B, D)
    assert bool(jnp.all(jnp.isfinite(out)))
    assert float(jnp.min(out)) >= 0.0        # ReLU output is non-negative
    # Loose tolerance: the kernel runs bf16 MXU passes (f32 accumulation),
    # which differ slightly from the f32 XLA reference path.
    err = float(jnp.max(jnp.abs(out - ref)))
    assert jnp.allclose(out, ref, atol=5e-2, rtol=5e-2), err

    # Second run exercises the padding / multi-step-grid path
    # (batch not a multiple of the batch tile, grid length 2).
    B2 = 100
    x2 = jax.random.normal(k_x2, (B2, D), jnp.float32)
    out2 = midfc(x2, weights, biases, block_b=64)
    jax.block_until_ready(out2)
    ref2 = _reference_midfc(x2, weights, biases)
    assert out2.shape == (B2, D)
    assert bool(jnp.all(jnp.isfinite(out2)))
    err2 = float(jnp.max(jnp.abs(out2 - ref2)))
    assert jnp.allclose(out2, ref2, atol=5e-2, rtol=5e-2), err2

    print("KERNEL_OK")
</pallas_src>

<mosaic_0001>
module attributes {stable_mosaic.version = 11 : i64} {
  func.func @midfc_kernel(%arg0: i32, %arg1: memref<8x128xf32, #tpu.memory_space<vmem>>, %arg2: memref<3x128x128xbf16, #tpu.memory_space<vmem>>, %arg3: memref<3x1x128xf32, #tpu.memory_space<vmem>>, %arg4: memref<8x128xf32, #tpu.memory_space<vmem>>) attributes {dimension_semantics = [#tpu.dimension_semantics<parallel>], iteration_bounds = array<i64: 1>, scalar_prefetch = 0 : i64, scratch_operands = 0 : i64, tpu.core_type = #tpu.core_type<tc>, window_params = [{transform_indices = @transform_0, window_bounds = array<i64: 8, 128>}, {pipeline_mode = #tpu.pipeline_mode<synchronous>, transform_indices = @transform_1, window_bounds = array<i64: 3, 128, 128>}, {pipeline_mode = #tpu.pipeline_mode<synchronous>, transform_indices = @transform_2, window_bounds = array<i64: 3, 1, 128>}, {transform_indices = @transform_3, window_bounds = array<i64: 8, 128>}]} {
    %c0 = arith.constant 0 : index
    %c0_0 = arith.constant 0 : index
    %0 = vector.load %arg1[%c0, %c0_0] : memref<8x128xf32, #tpu.memory_space<vmem>>, vector<8x128xf32>
    %1 = arith.truncf %0 : vector<8x128xf32> to vector<8x128xbf16>
    %c0_1 = arith.constant 0 : index
    %c0_2 = arith.constant 0 : index
    %c0_3 = arith.constant 0 : index
    %2 = vector.load %arg2[%c0_1, %c0_2, %c0_3] : memref<3x128x128xbf16, #tpu.memory_space<vmem>>, vector<1x128x128xbf16>
    %3 = vector.shape_cast %2 : vector<1x128x128xbf16> to vector<128x128xbf16>
    %cst = arith.constant dense<0.000000e+00> : vector<8x128xf32>
    %4 = tpu.matmul %1, %3, %cst {dimension_numbers = #tpu.dot_dimension_numbers<[1], [0], [0], [1], [0, 0, 1, 1], [], []>} : vector<8x128xbf16>, vector<128x128xbf16>, vector<8x128xf32> -> vector<8x128xf32>
    %c0_4 = arith.constant 0 : index
    %c0_5 = arith.constant 0 : index
    %c0_6 = arith.constant 0 : index
    %5 = vector.load %arg3[%c0_4, %c0_5, %c0_6] : memref<3x1x128xf32, #tpu.memory_space<vmem>>, vector<1x1x128xf32>
    %6 = vector.shape_cast %5 : vector<1x1x128xf32> to vector<1x128xf32>
    %7 = vector.broadcast %6 : vector<1x128xf32> to vector<8x128xf32>
    %8 = arith.addf %4, %7 : vector<8x128xf32>
    %cst_7 = arith.constant dense<0.000000e+00> : vector<8xf32>
    %9 = vector.multi_reduction <add>, %8, %cst_7 [1] : vector<8x128xf32> to vector<8xf32>
    %10 = vector.shape_cast %9 : vector<8xf32> to vector<8x1xf32>
    %cst_8 = arith.constant 7.812500e-03 : f32
    %11 = vector.broadcast %cst_8 : f32 to vector<8x1xf32>
    %12 = arith.mulf %10, %11 : vector<8x1xf32>
    %13 = arith.mulf %8, %8 : vector<8x128xf32>
    %cst_9 = arith.constant dense<0.000000e+00> : vector<8xf32>
    %14 = vector.multi_reduction <add>, %13, %cst_9 [1] : vector<8x128xf32> to vector<8xf32>
    %15 = vector.shape_cast %14 : vector<8xf32> to vector<8x1xf32>
    %cst_10 = arith.constant 7.812500e-03 : f32
    %16 = vector.broadcast %cst_10 : f32 to vector<8x1xf32>
    %17 = arith.mulf %15, %16 : vector<8x1xf32>
    %18 = arith.mulf %12, %12 : vector<8x1xf32>
    %19 = arith.subf %17, %18 : vector<8x1xf32>
    %cst_11 = arith.constant 9.99999974E-6 : f32
    %20 = vector.broadcast %cst_11 : f32 to vector<8x1xf32>
    %21 = arith.addf %19, %20 : vector<8x1xf32>
    %22 = math.rsqrt %21 : vector<8x1xf32>
    %23 = vector.broadcast %22 : vector<8x1xf32> to vector<8x128xf32>
    %24 = arith.mulf %8, %23 : vector<8x128xf32>
    %25 = arith.mulf %12, %22 : vector<8x1xf32>
    %26 = vector.broadcast %25 : vector<8x1xf32> to vector<8x128xf32>
    %27 = arith.subf %24, %26 : vector<8x128xf32>
    %cst_12 = arith.constant 0.000000e+00 : f32
    %28 = vector.broadcast %cst_12 : f32 to vector<8x128xf32>
    %29 = arith.maximumf %27, %28 : vector<8x128xf32>
    %30 = arith.truncf %29 : vector<8x128xf32> to vector<8x128xbf16>
    %c1 = arith.constant 1 : index
    %c0_13 = arith.constant 0 : index
    %c0_14 = arith.constant 0 : index
    %31 = vector.load %arg2[%c1, %c0_13, %c0_14] : memref<3x128x128xbf16, #tpu.memory_space<vmem>>, vector<1x128x128xbf16>
    %32 = vector.shape_cast %31 : vector<1x128x128xbf16> to vector<128x128xbf16>
    %cst_15 = arith.constant dense<0.000000e+00> : vector<8x128xf32>
    %33 = tpu.matmul %30, %32, %cst_15 {dimension_numbers = #tpu.dot_dimension_numbers<[1], [0], [0], [1], [0, 0, 1, 1], [], []>} : vector<8x128xbf16>, vector<128x128xbf16>, vector<8x128xf32> -> vector<8x128xf32>
    %c1_16 = arith.constant 1 : index
    %c0_17 = arith.constant 0 : index
    %c0_18 = arith.constant 0 : index
    %34 = vector.load %arg3[%c1_16, %c0_17, %c0_18] : memref<3x1x128xf32, #tpu.memory_space<vmem>>, vector<1x1x128xf32>
    %35 = vector.shape_cast %34 : vector<1x1x128xf32> to vector<1x128xf32>
    %36 = vector.broadcast %35 : vector<1x128xf32> to vector<8x128xf32>
    %37 = arith.addf %33, %36 : vector<8x128xf32>
    %cst_19 = arith.constant dense<0.000000e+00> : vector<8xf32>
    %38 = vector.multi_reduction <add>, %37, %cst_19 [1] : vector<8x128xf32> to vector<8xf32>
    %39 = vector.shape_cast %38 : vector<8xf32> to vector<8x1xf32>
    %cst_20 = arith.constant 7.812500e-03 : f32
    %40 = vector.broadcast %cst_20 : f32 to vector<8x1xf32>
    %41 = arith.mulf %39, %40 : vector<8x1xf32>
    %42 = arith.mulf %37, %37 : vector<8x128xf32>
    %cst_21 = arith.constant dense<0.000000e+00> : vector<8xf32>
    %43 = vector.multi_reduction <add>, %42, %cst_21 [1] : vector<8x128xf32> to vector<8xf32>
    %44 = vector.shape_cast %43 : vector<8xf32> to vector<8x1xf32>
    %cst_22 = arith.constant 7.812500e-03 : f32
    %45 = vector.broadcast %cst_22 : f32 to vector<8x1xf32>
    %46 = arith.mulf %44, %45 : vector<8x1xf32>
    %47 = arith.mulf %41, %41 : vector<8x1xf32>
    %48 = arith.subf %46, %47 : vector<8x1xf32>
    %cst_23 = arith.constant 9.99999974E-6 : f32
    %49 = vector.broadcast %cst_23 : f32 to vector<8x1xf32>
    %50 = arith.addf %48, %49 : vector<8x1xf32>
    %51 = math.rsqrt %50 : vector<8x1xf32>
    %52 = vector.broadcast %51 : vector<8x1xf32> to vector<8x128xf32>
    %53 = arith.mulf %37, %52 : vector<8x128xf32>
    %54 = arith.mulf %41, %51 : vector<8x1xf32>
    %55 = vector.broadcast %54 : vector<8x1xf32> to vector<8x128xf32>
    %56 = arith.subf %53, %55 : vector<8x128xf32>
    %cst_24 = arith.constant 0.000000e+00 : f32
    %57 = vector.broadcast %cst_24 : f32 to vector<8x128xf32>
    %58 = arith.maximumf %56, %57 : vector<8x128xf32>
    %59 = arith.truncf %58 : vector<8x128xf32> to vector<8x128xbf16>
    %c2 = arith.constant 2 : index
    %c0_25 = arith.constant 0 : index
    %c0_26 = arith.constant 0 : index
    %60 = vector.load %arg2[%c2, %c0_25, %c0_26] : memref<3x128x128xbf16, #tpu.memory_space<vmem>>, vector<1x128x128xbf16>
    %61 = vector.shape_cast %60 : vector<1x128x128xbf16> to vector<128x128xbf16>
    %cst_27 = arith.constant dense<0.000000e+00> : vector<8x128xf32>
    %62 = tpu.matmul %59, %61, %cst_27 {dimension_numbers = #tpu.dot_dimension_numbers<[1], [0], [0], [1], [0, 0, 1, 1], [], []>} : vector<8x128xbf16>, vector<128x128xbf16>, vector<8x128xf32> -> vector<8x128xf32>
    %c2_28 = arith.constant 2 : index
    %c0_29 = arith.constant 0 : index
    %c0_30 = arith.constant 0 : index
    %63 = vector.load %arg3[%c2_28, %c0_29, %c0_30] : memref<3x1x128xf32, #tpu.memory_space<vmem>>, vector<1x1x128xf32>
    %64 = vector.shape_cast %63 : vector<1x1x128xf32> to vector<1x128xf32>
    %65 = vector.broadcast %64 : vector<1x128xf32> to vector<8x128xf32>
    %66 = arith.addf %62, %65 : vector<8x128xf32>
    %cst_31 = arith.constant dense<0.000000e+00> : vector<8xf32>
    %67 = vector.multi_reduction <add>, %66, %cst_31 [1] : vector<8x128xf32> to vector<8xf32>
    %68 = vector.shape_cast %67 : vector<8xf32> to vector<8x1xf32>
    %cst_32 = arith.constant 7.812500e-03 : f32
    %69 = vector.broadcast %cst_32 : f32 to vector<8x1xf32>
    %70 = arith.mulf %68, %69 : vector<8x1xf32>
    %71 = arith.mulf %66, %66 : vector<8x128xf32>
    %cst_33 = arith.constant dense<0.000000e+00> : vector<8xf32>
    %72 = vector.multi_reduction <add>, %71, %cst_33 [1] : vector<8x128xf32> to vector<8xf32>
    %73 = vector.shape_cast %72 : vector<8xf32> to vector<8x1xf32>
    %cst_34 = arith.constant 7.812500e-03 : f32
    %74 = vector.broadcast %cst_34 : f32 to vector<8x1xf32>
    %75 = arith.mulf %73, %74 : vector<8x1xf32>
    %76 = arith.mulf %70, %70 : vector<8x1xf32>
    %77 = arith.subf %75, %76 : vector<8x1xf32>
    %cst_35 = arith.constant 9.99999974E-6 : f32
    %78 = vector.broadcast %cst_35 : f32 to vector<8x1xf32>
    %79 = arith.addf %77, %78 : vector<8x1xf32>
    %80 = math.rsqrt %79 : vector<8x1xf32>
    %81 = vector.broadcast %80 : vector<8x1xf32> to vector<8x128xf32>
    %82 = arith.mulf %66, %81 : vector<8x128xf32>
    %83 = arith.mulf %70, %80 : vector<8x1xf32>
    %84 = vector.broadcast %83 : vector<8x1xf32> to vector<8x128xf32>
    %85 = arith.subf %82, %84 : vector<8x128xf32>
    %cst_36 = arith.constant 0.000000e+00 : f32
    %86 = vector.broadcast %cst_36 : f32 to vector<8x128xf32>
    %87 = arith.maximumf %85, %86 : vector<8x128xf32>
    %c0_37 = arith.constant 0 : index
    %c0_38 = arith.constant 0 : index
    %88 = vector.load %arg4[%c0_37, %c0_38] : memref<8x128xf32, #tpu.memory_space<vmem>>, vector<8x128xf32>
    tpu.vector_store %arg4[%c0_37, %c0_38], %87 {strides = array<i32>} : memref<8x128xf32, #tpu.memory_space<vmem>>, vector<8x128xf32>,
    return
  }
  func.func @transform_0(%arg0: i32) -> (i32, i32) {
    %c0_i32 = arith.constant 0 : i32
    %c0_i32_0 = arith.constant 0 : i32
    return %arg0, %c0_i32 : i32, i32
  }
  func.func @transform_1(%arg0: i32) -> (i32, i32, i32) {
    %c0_i32 = arith.constant 0 : i32
    %c0_i32_0 = arith.constant 0 : i32
    %c0_i32_1 = arith.constant 0 : i32
    %c0_i32_2 = arith.constant 0 : i32
    return %c0_i32, %c0_i32_0, %c0_i32_1 : i32, i32, i32
  }
  func.func @transform_2(%arg0: i32) -> (i32, i32, i32) {
    %c0_i32 = arith.constant 0 : i32
    %c0_i32_0 = arith.constant 0 : i32
    %c0_i32_1 = arith.constant 0 : i32
    %c0_i32_2 = arith.constant 0 : i32
    return %c0_i32, %c0_i32_0, %c0_i32_1 : i32, i32, i32
  }
  func.func @transform_3(%arg0: i32) -> (i32, i32) {
    %c0_i32 = arith.constant 0 : i32
    %c0_i32_0 = arith.constant 0 : i32
    return %arg0, %c0_i32 : i32, i32
  }
}

module attributes {stable_mosaic.version = 11 : i64} {
  func.func @midfc_kernel(%arg0: i32, %arg1: memref<8x128xf32, #tpu.memory_space<vmem>>, %arg2: memref<3x128x128xbf16, #tpu.memory_space<vmem>>, %arg3: memref<3x1x128xf32, #tpu.memory_space<vmem>>, %arg4: memref<8x128xf32, #tpu.memory_space<vmem>>) attributes {dimension_semantics = [#tpu.dimension_semantics<parallel>], iteration_bounds = array<i64: 1>, scalar_prefetch = 0 : i64, scratch_operands = 0 : i64, tpu.core_type = #tpu.core_type<tc>, window_params = [{transform_indices = @transform_0, window_bounds = array<i64: 8, 128>}, {pipeline_mode = #tpu.pipeline_mode<synchronous>, transform_indices = @transform_1, window_bounds = array<i64: 3, 128, 128>}, {pipeline_mode = #tpu.pipeline_mode<synchronous>, transform_indices = @transform_2, window_bounds = array<i64: 3, 1, 128>}, {transform_indices = @transform_3, window_bounds = array<i64: 8, 128>}]} {
    %c0 = arith.constant 0 : index
    %c0_0 = arith.constant 0 : index
    %0 = vector.load %arg1[%c0, %c0_0] : memref<8x128xf32, #tpu.memory_space<vmem>>, vector<8x128xf32>
    %1 = arith.truncf %0 : vector<8x128xf32> to vector<8x128xbf16>
    %c0_1 = arith.constant 0 : index
    %c0_2 = arith.constant 0 : index
    %c0_3 = arith.constant 0 : index
    %2 = vector.load %arg2[%c0_1, %c0_2, %c0_3] : memref<3x128x128xbf16, #tpu.memory_space<vmem>>, vector<1x128x128xbf16>
    %3 = vector.shape_cast %2 : vector<1x128x128xbf16> to vector<128x128xbf16>
    %cst = arith.constant dense<0.000000e+00> : vector<8x128xf32>
    %4 = tpu.matmul %1, %3, %cst {dimension_numbers = #tpu.dot_dimension_numbers<[1], [0], [0], [1], [0, 0, 1, 1], [], []>} : vector<8x128xbf16>, vector<128x128xbf16>, vector<8x128xf32> -> vector<8x128xf32>
    %c0_4 = arith.constant 0 : index
    %c0_5 = arith.constant 0 : index
    %c0_6 = arith.constant 0 : index
    %5 = vector.load %arg3[%c0_4, %c0_5, %c0_6] : memref<3x1x128xf32, #tpu.memory_space<vmem>>, vector<1x1x128xf32>
    %6 = vector.shape_cast %5 : vector<1x1x128xf32> to vector<1x128xf32>
    %7 = vector.broadcast %6 : vector<1x128xf32> to vector<8x128xf32>
    %8 = arith.addf %4, %7 : vector<8x128xf32>
    %cst_7 = arith.constant dense<0.000000e+00> : vector<8xf32>
    %9 = vector.multi_reduction <add>, %8, %cst_7 [1] : vector<8x128xf32> to vector<8xf32>
    %10 = vector.shape_cast %9 : vector<8xf32> to vector<8x1xf32>
    %cst_8 = arith.constant 7.812500e-03 : f32
    %11 = vector.broadcast %cst_8 : f32 to vector<8x1xf32>
    %12 = arith.mulf %10, %11 : vector<8x1xf32>
    %13 = arith.mulf %8, %8 : vector<8x128xf32>
    %cst_9 = arith.constant dense<0.000000e+00> : vector<8xf32>
    %14 = vector.multi_reduction <add>, %13, %cst_9 [1] : vector<8x128xf32> to vector<8xf32>
    %15 = vector.shape_cast %14 : vector<8xf32> to vector<8x1xf32>
    %cst_10 = arith.constant 7.812500e-03 : f32
    %16 = vector.broadcast %cst_10 : f32 to vector<8x1xf32>
    %17 = arith.mulf %15, %16 : vector<8x1xf32>
    %18 = arith.mulf %12, %12 : vector<8x1xf32>
    %19 = arith.subf %17, %18 : vector<8x1xf32>
    %cst_11 = arith.constant 9.99999974E-6 : f32
    %20 = vector.broadcast %cst_11 : f32 to vector<8x1xf32>
    %21 = arith.addf %19, %20 : vector<8x1xf32>
    %22 = math.rsqrt %21 : vector<8x1xf32>
    %23 = vector.broadcast %22 : vector<8x1xf32> to vector<8x128xf32>
    %24 = arith.mulf %8, %23 : vector<8x128xf32>
    %25 = arith.mulf %12, %22 : vector<8x1xf32>
    %26 = vector.broadcast %25 : vector<8x1xf32> to vector<8x128xf32>
    %27 = arith.subf %24, %26 : vector<8x128xf32>
    %cst_12 = arith.constant 0.000000e+00 : f32
    %28 = vector.broadcast %cst_12 : f32 to vector<8x128xf32>
    %29 = arith.maximumf %27, %28 : vector<8x128xf32>
    %30 = arith.truncf %29 : vector<8x128xf32> to vector<8x128xbf16>
    %c1 = arith.constant 1 : index
    %c0_13 = arith.constant 0 : index
    %c0_14 = arith.constant 0 : index
    %31 = vector.load %arg2[%c1, %c0_13, %c0_14] : memref<3x128x128xbf16, #tpu.memory_space<vmem>>, vector<1x128x128xbf16>
    %32 = vector.shape_cast %31 : vector<1x128x128xbf16> to vector<128x128xbf16>
    %cst_15 = arith.constant dense<0.000000e+00> : vector<8x128xf32>
    %33 = tpu.matmul %30, %32, %cst_15 {dimension_numbers = #tpu.dot_dimension_numbers<[1], [0], [0], [1], [0, 0, 1, 1], [], []>} : vector<8x128xbf16>, vector<128x128xbf16>, vector<8x128xf32> -> vector<8x128xf32>
    %c1_16 = arith.constant 1 : index
    %c0_17 = arith.constant 0 : index
    %c0_18 = arith.constant 0 : index
    %34 = vector.load %arg3[%c1_16, %c0_17, %c0_18] : memref<3x1x128xf32, #tpu.memory_space<vmem>>, vector<1x1x128xf32>
    %35 = vector.shape_cast %34 : vector<1x1x128xf32> to vector<1x128xf32>
    %36 = vector.broadcast %35 : vector<1x128xf32> to vector<8x128xf32>
    %37 = arith.addf %33, %36 : vector<8x128xf32>
    %cst_19 = arith.constant dense<0.000000e+00> : vector<8xf32>
    %38 = vector.multi_reduction <add>, %37, %cst_19 [1] : vector<8x128xf32> to vector<8xf32>
    %39 = vector.shape_cast %38 : vector<8xf32> to vector<8x1xf32>
    %cst_20 = arith.constant 7.812500e-03 : f32
    %40 = vector.broadcast %cst_20 : f32 to vector<8x1xf32>
    %41 = arith.mulf %39, %40 : vector<8x1xf32>
    %42 = arith.mulf %37, %37 : vector<8x128xf32>
    %cst_21 = arith.constant dense<0.000000e+00> : vector<8xf32>
    %43 = vector.multi_reduction <add>, %42, %cst_21 [1] : vector<8x128xf32> to vector<8xf32>
    %44 = vector.shape_cast %43 : vector<8xf32> to vector<8x1xf32>
    %cst_22 = arith.constant 7.812500e-03 : f32
    %45 = vector.broadcast %cst_22 : f32 to vector<8x1xf32>
    %46 = arith.mulf %44, %45 : vector<8x1xf32>
    %47 = arith.mulf %41, %41 : vector<8x1xf32>
    %48 = arith.subf %46, %47 : vector<8x1xf32>
    %cst_23 = arith.constant 9.99999974E-6 : f32
    %49 = vector.broadcast %cst_23 : f32 to vector<8x1xf32>
    %50 = arith.addf %48, %49 : vector<8x1xf32>
    %51 = math.rsqrt %50 : vector<8x1xf32>
    %52 = vector.broadcast %51 : vector<8x1xf32> to vector<8x128xf32>
    %53 = arith.mulf %37, %52 : vector<8x128xf32>
    %54 = arith.mulf %41, %51 : vector<8x1xf32>
    %55 = vector.broadcast %54 : vector<8x1xf32> to vector<8x128xf32>
    %56 = arith.subf %53, %55 : vector<8x128xf32>
    %cst_24 = arith.constant 0.000000e+00 : f32
    %57 = vector.broadcast %cst_24 : f32 to vector<8x128xf32>
    %58 = arith.maximumf %56, %57 : vector<8x128xf32>
    %59 = arith.truncf %58 : vector<8x128xf32> to vector<8x128xbf16>
    %c2 = arith.constant 2 : index
    %c0_25 = arith.constant 0 : index
    %c0_26 = arith.constant 0 : index
    %60 = vector.load %arg2[%c2, %c0_25, %c0_26] : memref<3x128x128xbf16, #tpu.memory_space<vmem>>, vector<1x128x128xbf16>
    %61 = vector.shape_cast %60 : vector<1x128x128xbf16> to vector<128x128xbf16>
    %cst_27 = arith.constant dense<0.000000e+00> : vector<8x128xf32>
    %62 = tpu.matmul %59, %61, %cst_27 {dimension_numbers = #tpu.dot_dimension_numbers<[1], [0], [0], [1], [0, 0, 1, 1], [], []>} : vector<8x128xbf16>, vector<128x128xbf16>, vector<8x128xf32> -> vector<8x128xf32>
    %c2_28 = arith.constant 2 : index
    %c0_29 = arith.constant 0 : index
    %c0_30 = arith.constant 0 : index
    %63 = vector.load %arg3[%c2_28, %c0_29, %c0_30] : memref<3x1x128xf32, #tpu.memory_space<vmem>>, vector<1x1x128xf32>
    %64 = vector.shape_cast %63 : vector<1x1x128xf32> to vector<1x128xf32>
    %65 = vector.broadcast %64 : vector<1x128xf32> to vector<8x128xf32>
    %66 = arith.addf %62, %65 : vector<8x128xf32>
    %cst_31 = arith.constant dense<0.000000e+00> : vector<8xf32>
    %67 = vector.multi_reduction <add>, %66, %cst_31 [1] : vector<8x128xf32> to vector<8xf32>
    %68 = vector.shape_cast %67 : vector<8xf32> to vector<8x1xf32>
    %cst_32 = arith.constant 7.812500e-03 : f32
    %69 = vector.broadcast %cst_32 : f32 to vector<8x1xf32>
    %70 = arith.mulf %68, %69 : vector<8x1xf32>
    %71 = arith.mulf %66, %66 : vector<8x128xf32>
    %cst_33 = arith.constant dense<0.000000e+00> : vector<8xf32>
    %72 = vector.multi_reduction <add>, %71, %cst_33 [1] : vector<8x128xf32> to vector<8xf32>
    %73 = vector.shape_cast %72 : vector<8xf32> to vector<8x1xf32>
    %cst_34 = arith.constant 7.812500e-03 : f32
    %74 = vector.broadcast %cst_34 : f32 to vector<8x1xf32>
    %75 = arith.mulf %73, %74 : vector<8x1xf32>
    %76 = arith.mulf %70, %70 : vector<8x1xf32>
    %77 = arith.subf %75, %76 : vector<8x1xf32>
    %cst_35 = arith.constant 9.99999974E-6 : f32
    %78 = vector.broadcast %cst_35 : f32 to vector<8x1xf32>
    %79 = arith.addf %77, %78 : vector<8x1xf32>
    %80 = math.rsqrt %79 : vector<8x1xf32>
    %81 = vector.broadcast %80 : vector<8x1xf32> to vector<8x128xf32>
    %82 = arith.mulf %66, %81 : vector<8x128xf32>
    %83 = arith.mulf %70, %80 : vector<8x1xf32>
    %84 = vector.broadcast %83 : vector<8x1xf32> to vector<8x128xf32>
    %85 = arith.subf %82, %84 : vector<8x128xf32>
    %cst_36 = arith.constant 0.000000e+00 : f32
    %86 = vector.broadcast %cst_36 : f32 to vector<8x128xf32>
    %87 = arith.maximumf %85, %86 : vector<8x128xf32>
    %c0_37 = arith.constant 0 : index
    %c0_38 = arith.constant 0 : index
    %88 = vector.load %arg4[%c0_37, %c0_38] : memref<8x128xf32, #tpu.memory_space<vmem>>, vector<8x128xf32>
    tpu.vector_store %arg4[%c0_37, %c0_38], %87 {strides = array<i32>} : memref<8x128xf32, #tpu.memory_space<vmem>>, vector<8x128xf32>,
    return
  }
  func.func @transform_0(%arg0: i32) -> (i32, i32) {
    %c0_i32 = arith.constant 0 : i32
    %c0_i32_0 = arith.constant 0 : i32
    return %arg0, %c0_i32 : i32, i32
  }
  func.func @transform_1(%arg0: i32) -> (i32, i32, i32) {
    %c0_i32 = arith.constant 0 : i32
    %c0_i32_0 = arith.constant 0 : i32
    %c0_i32_1 = arith.constant 0 : i32
    %c0_i32_2 = arith.constant 0 : i32
    return %c0_i32, %c0_i32_0, %c0_i32_1 : i32, i32, i32
  }
  func.func @transform_2(%arg0: i32) -> (i32, i32, i32) {
    %c0_i32 = arith.constant 0 : i32
    %c0_i32_0 = arith.constant 0 : i32
    %c0_i32_1 = arith.constant 0 : i32
    %c0_i32_2 = arith.constant 0 : i32
    return %c0_i32, %c0_i32_0, %c0_i32_1 : i32, i32, i32
  }
  func.func @transform_3(%arg0: i32) -> (i32, i32) {
    %c0_i32 = arith.constant 0 : i32
    %c0_i32_0 = arith.constant 0 : i32
    return %arg0, %c0_i32 : i32, i32
  }
}

</mosaic_0001>

<llo_original>
// kernel: tpu_custom_call.1
$region0: #{tpu_custom_call.1}
  #allocation0 [shape = 'u32[]', space=smem, size = 0x4, offset = 0x4, fixed_abs, tag = 'smem constant byte address 0x4 - core index']
  #allocation1 [shape = 'u32[72,128]{1,0:T(1,128)}', space=vmem, size = 0x9000, scoped, tag = 'internal scratch']
  %s0 = inlined_call_operand.hbm [shape: f32[8,128], index: 0, kind: input, shape index: {}]
  %s1 = inlined_call_operand.hbm [shape: bf16[3,128,128], index: 1, kind: input, shape index: {}]
  %s2 = inlined_call_operand.hbm [shape: f32[3,1,128], index: 2, kind: input, shape index: {}]
  %s3 = inlined_call_operand.hbm [shape: f32[8,128], index: 3, kind: output, shape index: {}]
  %s4 = sld [smem:[#allocation0]]
  $region34: #{tpu_custom_call.1} parent=0
    _
  %s6 = ssub.s32 1, %s4
  %s7 = scalar_select 0, %s6, %s4
  $region1: #{tpu_custom_call.1} parent=0
    #allocation2 [shape = 'u8[4096]{0}', space=vmem, size = 0x1000, scoped, tag = 'input window, operand 0, single buffered']
    #allocation3 [shape = 's32[1]{0}', space=sflag, size = 0x4, scoped, tag = 'scoped memory for tpu_custom_call.1']
    #allocation4 [shape = 's32[1]{0}', space=sflag, size = 0x4, scoped, tag = 'scoped memory for tpu_custom_call.1']
    #allocation5 [shape = 'u8[98304]{0}', space=vmem, size = 0x18000, scoped, tag = 'input window, operand 1, single buffered']
    #allocation6 [shape = 's32[1]{0}', space=sflag, size = 0x4, scoped, tag = 'scoped memory for tpu_custom_call.1']
    #allocation7 [shape = 'u8[1536]{0}', space=vmem, size = 0x800, scoped, tag = 'input window, operand 2, single buffered']
    #allocation8 [shape = 'u8[4096]{0}', space=vmem, size = 0x1000, scoped, tag = 'output window, operand 0, single buffered']
    %8 = vsyncpa [#allocation3], 0
    %9 = vsyncpa [#allocation6], 0
    %10 = vsyncpa [#allocation4], 0
    // Predicated region
    $region2: #{tpu_custom_call.1} parent=1 // pred_check
      _
    $region3: #{tpu_custom_call.1} parent=1 // pred_check_branch
      %12 = sbr.rel (0) target = $region5
    $region4: #{tpu_custom_call.1} parent=1 // pred_region
      %14 = vsyncadd [#allocation3], 0
      %s16 = sshll.u32 %s0, 4
      %s17 = int_to_ptr.hbm [resolvable:$true] %s16
      %s18 = sshll.u32 [#allocation2], 4
      %s19 = int_to_ptr.vmem [resolvable:$true] %s18
      %21 = dma.hbm_to_vmem [thread:$0]  %s17, 128, %s19, [#allocation3]
    $region5: #{tpu_custom_call.1} parent=1 // pred_fallthru
      _
    // Predicated region
    $region6: #{tpu_custom_call.1} parent=1 // pred_check
      _
    $region7: #{tpu_custom_call.1} parent=1 // pred_check_branch
      %23 = sbr.rel (0) target = $region9
    $region8: #{tpu_custom_call.1} parent=1 // pred_region
      %25 = vsyncadd [#allocation6], 0
      %s26 = sshll.u32 %s1, 4
      %s27 = int_to_ptr.hbm [resolvable:$true] %s26
      %s28 = sshll.u32 [#allocation5], 4
      %s29 = int_to_ptr.vmem [resolvable:$true] %s28
      %34 = dma.hbm_to_vmem [thread:$0]  %s27, 3072, %s29, [#allocation6], 64, 64, 4
    $region9: #{tpu_custom_call.1} parent=1 // pred_fallthru
      _
    // Predicated region
    $region10: #{tpu_custom_call.1} parent=1 // pred_check
      _
    $region11: #{tpu_custom_call.1} parent=1 // pred_check_branch
      %36 = sbr.rel (0) target = $region13
    $region12: #{tpu_custom_call.1} parent=1 // pred_region
      %38 = vsyncadd [#allocation6], 0
      %s39 = sshll.u32 %s2, 4
      %s40 = int_to_ptr.hbm [resolvable:$true] %s39
      %s41 = sshll.u32 [#allocation7], 4
      %s42 = int_to_ptr.vmem [resolvable:$true] %s41
      %47 = dma.hbm_to_vmem [thread:$0]  %s40, 48, %s42, [#allocation6], 16, 16, 1
    $region13: #{tpu_custom_call.1} parent=1 // pred_fallthru
      _
    // Predicated region
    $region14: #{tpu_custom_call.1} parent=1 // pred_check
      _
    $region15: #{tpu_custom_call.1} parent=1 // pred_check_branch
      %49 = sbr.rel (0) target = $region17
    $region16: #{tpu_custom_call.1} parent=1 // pred_region
      %51 = dma.done [#allocation3], 128
    $region17: #{tpu_custom_call.1} parent=1 // pred_fallthru
      _
    // Predicated region
    $region18: #{tpu_custom_call.1} parent=1 // pred_check
      _
    $region19: #{tpu_custom_call.1} parent=1 // pred_check_branch
      %53 = sbr.rel (0) target = $region21
    $region20: #{tpu_custom_call.1} parent=1 // pred_region
      %55 = dma.done [#allocation6], 3072
    $region21: #{tpu_custom_call.1} parent=1 // pred_fallthru
      _
    // Predicated region
    $region22: #{tpu_custom_call.1} parent=1 // pred_check
      _
    $region23: #{tpu_custom_call.1} parent=1 // pred_check_branch
      %57 = sbr.rel (0) target = $region25
    $region24: #{tpu_custom_call.1} parent=1 // pred_region
      %59 = dma.done [#allocation6], 48
    $region25: #{tpu_custom_call.1} parent=1 // pred_fallthru
      _
    %v60 = vld [vmem:[#allocation2] sm:$0xff]
    %v61 = vpack.c.bf16 %v60, %v60
    %v62 = vld [vmem:[#allocation5] sm:$0xf]
    %v63 = vld [vmem:[#allocation5 + $0x4] sm:$0xf]
    %v64 = vld [vmem:[#allocation5 + $0x8] sm:$0xf]
    %v65 = vld [vmem:[#allocation5 + $0xc] sm:$0xf]
    %v66 = vld [vmem:[#allocation5 + $0x10] sm:$0xf]
    %v67 = vld [vmem:[#allocation5 + $0x14] sm:$0xf]
    %v68 = vld [vmem:[#allocation5 + $0x18] sm:$0xf]
    %v69 = vld [vmem:[#allocation5 + $0x1c] sm:$0xf]
    %v70 = vld [vmem:[#allocation5 + $0x20] sm:$0xf]
    %v71 = vld [vmem:[#allocation5 + $0x24] sm:$0xf]
    %v72 = vld [vmem:[#allocation5 + $0x28] sm:$0xf]
    %v73 = vld [vmem:[#allocation5 + $0x2c] sm:$0xf]
    %v74 = vld [vmem:[#allocation5 + $0x30] sm:$0xf]
    %v75 = vld [vmem:[#allocation5 + $0x34] sm:$0xf]
    %v76 = vld [vmem:[#allocation5 + $0x38] sm:$0xf]
    %v77 = vld [vmem:[#allocation5 + $0x3c] sm:$0xf]
    %v78 = vld [vmem:[#allocation7] sm:$0x1]
    %v80 = vperm.slane %v78, 0
    %v98 = vunpack.c.l.b16 %v62
    %v99 = vunpack.c.l.b16 %v63
    %v100 = vunpack.c.l.b16 %v64
    %v101 = vunpack.c.l.b16 %v65
    %v102 = vunpack.c.l.b16 %v66
    %v103 = vunpack.c.l.b16 %v67
    %v104 = vunpack.c.l.b16 %v68
    %v105 = vunpack.c.l.b16 %v69
    %v106 = vunpack.c.l.b16 %v70
    %v107 = vunpack.c.l.b16 %v71
    %v108 = vunpack.c.l.b16 %v72
    %v109 = vunpack.c.l.b16 %v73
    %v110 = vunpack.c.l.b16 %v74
    %v111 = vunpack.c.l.b16 %v75
    %v112 = vunpack.c.l.b16 %v76
    %v113 = vunpack.c.l.b16 %v77
    %v114 = vpack.c.b16 %v99, %v98
    %v115 = vpack.c.b16 %v101, %v100
    %v116 = vpack.c.b16 %v103, %v102
    %v117 = vpack.c.b16 %v105, %v104
    %v118 = vpack.c.b16 %v107, %v106
    %v119 = vpack.c.b16 %v109, %v108
    %v120 = vpack.c.b16 %v111, %v110
    %v121 = vpack.c.b16 %v113, %v112
    %130 = vmatpush.bf16.msra.mxu0 %v121
    %131 = vmatpush.bf16.msra.mxu0 %v120
    %132 = vmatpush.bf16.msra.mxu0 %v119
    %133 = vmatpush.bf16.msra.mxu0 %v118
    %134 = vmatpush.bf16.msra.mxu0 %v117
    %135 = vmatpush.bf16.msra.mxu0 %v116
    %136 = vmatpush.bf16.msra.mxu0 %v115
    %137 = vmatpush.bf16.msra.mxu0 %v114
    %138 = vmatmul.bf16.gmra.mxu0 %v61
    %v139 = vpop.f32.mrf.mxu0
    %v140 = vadd.f32 %v80, %v139
    %v141 = vpop.f32.mrf.mxu0
    %142 = vdwg.mxu0
    %143 = vadd.xlane.f32.xlu0 %v140
    %v144 = vpop.xlane.xlu0 %143
    %v145 = vmul.f32 %v144, 0.0078125
    %v146 = vmul.f32 %v140, %v140
    %147 = vadd.xlane.f32.xlu0 %v146
    %v148 = vpop.xlane.xlu0 %147
    %v149 = vmul.f32 %v148, 0.0078125
    %v150 = vmul.f32 %v145, %v145
    %v151 = vsub.f32 %v149, %v150
    %v152 = vadd.f32 %v151, 1e-05
    %v153 = vrsqrt.pop %v152
    %v154 = vmul.f32 %v153, %v152
    %v155 = vmul.f32 %v154, %v153
    %v156 = vmul.f32 0.5, %v155
    %v157 = vsub.f32 1.5, %v156
    %v158 = vmul.f32 %v153, %v157
    %vm159 = vweird.f32 %v152
    %vm160 = vweird.f32 %v153
    %vm161 = vmor %vm159, %vm160
    %v162 = vsel %vm161, %v153, %v158
    %v163 = vmul.f32 %v140, %v162
    %v164 = vmul.f32 %v145, %v162
    %v165 = vsub.f32 %v163, %v164
    %v166 = vmax.f32 %v165, 0.0
    %v167 = vpack.c.bf16 %v166, %v166
    %s168 = scalar_lea.vmem [#allocation5], 64
    %v169 = vld [vmem:[%s168] sm:$0xf]
    %v170 = vld [vmem:[%s168 + $0x4] sm:$0xf]
    %v171 = vld [vmem:[%s168 + $0x8] sm:$0xf]
    %v172 = vld [vmem:[%s168 + $0xc] sm:$0xf]
    %v173 = vld [vmem:[%s168 + $0x10] sm:$0xf]
    %v174 = vld [vmem:[%s168 + $0x14] sm:$0xf]
    %v175 = vld [vmem:[%s168 + $0x18] sm:$0xf]
    %v176 = vld [vmem:[%s168 + $0x1c] sm:$0xf]
    %v177 = vld [vmem:[%s168 + $0x20] sm:$0xf]
    %v178 = vld [vmem:[%s168 + $0x24] sm:$0xf]
    %v179 = vld [vmem:[%s168 + $0x28] sm:$0xf]
    %v180 = vld [vmem:[%s168 + $0x2c] sm:$0xf]
    %v181 = vld [vmem:[%s168 + $0x30] sm:$0xf]
    %v182 = vld [vmem:[%s168 + $0x34] sm:$0xf]
    %v183 = vld [vmem:[%s168 + $0x38] sm:$0xf]
    %v184 = vld [vmem:[%s168 + $0x3c] sm:$0xf]
    %s185 = scalar_lea.vmem [#allocation7], 1
    %v186 = vld [vmem:[%s185] sm:$0x1]
    %v188 = vperm.slane %v186, 0
    %v206 = vunpack.c.l.b16 %v169
    %v207 = vunpack.c.l.b16 %v170
    %v208 = vunpack.c.l.b16 %v171
    %v209 = vunpack.c.l.b16 %v172
    %v210 = vunpack.c.l.b16 %v173
    %v211 = vunpack.c.l.b16 %v174
    %v212 = vunpack.c.l.b16 %v175
    %v213 = vunpack.c.l.b16 %v176
    %v214 = vunpack.c.l.b16 %v177
    %v215 = vunpack.c.l.b16 %v178
    %v216 = vunpack.c.l.b16 %v179
    %v217 = vunpack.c.l.b16 %v180
    %v218 = vunpack.c.l.b16 %v181
    %v219 = vunpack.c.l.b16 %v182
    %v220 = vunpack.c.l.b16 %v183
    %v221 = vunpack.c.l.b16 %v184
    %v222 = vpack.c.b16 %v207, %v206
    %v223 = vpack.c.b16 %v209, %v208
    %v224 = vpack.c.b16 %v211, %v210
    %v225 = vpack.c.b16 %v213, %v212
    %v226 = vpack.c.b16 %v215, %v214
    %v227 = vpack.c.b16 %v217, %v216
    %v228 = vpack.c.b16 %v219, %v218
    %v229 = vpack.c.b16 %v221, %v220
    %238 = vmatpush.bf16.msra.mxu0 %v229
    %239 = vmatpush.bf16.msra.mxu0 %v228
    %240 = vmatpush.bf16.msra.mxu0 %v227
    %241 = vmatpush.bf16.msra.mxu0 %v226
    %242 = vmatpush.bf16.msra.mxu0 %v225
    %243 = vmatpush.bf16.msra.mxu0 %v224
    %244 = vmatpush.bf16.msra.mxu0 %v223
    %245 = vmatpush.bf16.msra.mxu0 %v222
    %246 = vmatmul.bf16.gmra.mxu0 %v167
    %v247 = vpop.f32.mrf.mxu0
    %v248 = vadd.f32 %v188, %v247
    %v249 = vpop.f32.mrf.mxu0
    %250 = vdwg.mxu0
    %251 = vadd.xlane.f32.xlu0 %v248
    %v252 = vpop.xlane.xlu0 %251
    %v253 = vmul.f32 %v252, 0.0078125
    %v254 = vmul.f32 %v248, %v248
    %255 = vadd.xlane.f32.xlu0 %v254
    %v256 = vpop.xlane.xlu0 %255
    %v257 = vmul.f32 %v256, 0.0078125
    %v258 = vmul.f32 %v253, %v253
    %v259 = vsub.f32 %v257, %v258
    %v260 = vadd.f32 %v259, 1e-05
    %v261 = vrsqrt.pop %v260
    %v262 = vmul.f32 %v261, %v260
    %v263 = vmul.f32 %v262, %v261
    %v264 = vmul.f32 0.5, %v263
    %v265 = vsub.f32 1.5, %v264
    %v266 = vmul.f32 %v261, %v265
    %vm267 = vweird.f32 %v260
    %vm268 = vweird.f32 %v261
    %vm269 = vmor %vm267, %vm268
    %v270 = vsel %vm269, %v261, %v266
    %v271 = vmul.f32 %v248, %v270
    %v272 = vmul.f32 %v253, %v270
    %v273 = vsub.f32 %v271, %v272
    %v274 = vmax.f32 %v273, 0.0
    %v275 = vpack.c.bf16 %v274, %v274
    %s276 = scalar_lea.vmem [#allocation5], 128
    %v277 = vld [vmem:[%s276] sm:$0xf]
    %v278 = vld [vmem:[%s276 + $0x4] sm:$0xf]
    %v279 = vld [vmem:[%s276 + $0x8] sm:$0xf]
    %v280 = vld [vmem:[%s276 + $0xc] sm:$0xf]
    %v281 = vld [vmem:[%s276 + $0x10] sm:$0xf]
    %v282 = vld [vmem:[%s276 + $0x14] sm:$0xf]
    %v283 = vld [vmem:[%s276 + $0x18] sm:$0xf]
    %v284 = vld [vmem:[%s276 + $0x1c] sm:$0xf]
    %v285 = vld [vmem:[%s276 + $0x20] sm:$0xf]
    %v286 = vld [vmem:[%s276 + $0x24] sm:$0xf]
    %v287 = vld [vmem:[%s276 + $0x28] sm:$0xf]
    %v288 = vld [vmem:[%s276 + $0x2c] sm:$0xf]
    %v289 = vld [vmem:[%s276 + $0x30] sm:$0xf]
    %v290 = vld [vmem:[%s276 + $0x34] sm:$0xf]
    %v291 = vld [vmem:[%s276 + $0x38] sm:$0xf]
    %v292 = vld [vmem:[%s276 + $0x3c] sm:$0xf]
    %s293 = scalar_lea.vmem [#allocation7], 2
    %v294 = vld [vmem:[%s293] sm:$0x1]
    %v296 = vperm.slane %v294, 0
    %v314 = vunpack.c.l.b16 %v277
    %v315 = vunpack.c.l.b16 %v278
    %v316 = vunpack.c.l.b16 %v279
    %v317 = vunpack.c.l.b16 %v280
    %v318 = vunpack.c.l.b16 %v281
    %v319 = vunpack.c.l.b16 %v282
    %v320 = vunpack.c.l.b16 %v283
    %v321 = vunpack.c.l.b16 %v284
    %v322 = vunpack.c.l.b16 %v285
    %v323 = vunpack.c.l.b16 %v286
    %v324 = vunpack.c.l.b16 %v287
    %v325 = vunpack.c.l.b16 %v288
    %v326 = vunpack.c.l.b16 %v289
    %v327 = vunpack.c.l.b16 %v290
    %v328 = vunpack.c.l.b16 %v291
    %v329 = vunpack.c.l.b16 %v292
    %v330 = vpack.c.b16 %v315, %v314
    %v331 = vpack.c.b16 %v317, %v316
    %v332 = vpack.c.b16 %v319, %v318
    %v333 = vpack.c.b16 %v321, %v320
    %v334 = vpack.c.b16 %v323, %v322
    %v335 = vpack.c.b16 %v325, %v324
    %v336 = vpack.c.b16 %v327, %v326
    %v337 = vpack.c.b16 %v329, %v328
    %346 = vmatpush.bf16.msra.mxu0 %v337
    %347 = vmatpush.bf16.msra.mxu0 %v336
    %348 = vmatpush.bf16.msra.mxu0 %v335
    %349 = vmatpush.bf16.msra.mxu0 %v334
    %350 = vmatpush.bf16.msra.mxu0 %v333
    %351 = vmatpush.bf16.msra.mxu0 %v332
    %352 = vmatpush.bf16.msra.mxu0 %v331
    %353 = vmatpush.bf16.msra.mxu0 %v330
    %354 = vmatmul.bf16.gmra.mxu0 %v275
    %v355 = vpop.f32.mrf.mxu0
    %v356 = vadd.f32 %v296, %v355
    %v357 = vpop.f32.mrf.mxu0
    %358 = vdwg.mxu0
    %359 = vadd.xlane.f32.xlu0 %v356
    %v360 = vpop.xlane.xlu0 %359
    %v361 = vmul.f32 %v360, 0.0078125
    %v362 = vmul.f32 %v356, %v356
    %363 = vadd.xlane.f32.xlu0 %v362
    %v364 = vpop.xlane.xlu0 %363
    %v365 = vmul.f32 %v364, 0.0078125
    %v366 = vmul.f32 %v361, %v361
    %v367 = vsub.f32 %v365, %v366
    %v368 = vadd.f32 %v367, 1e-05
    %v369 = vrsqrt.pop %v368
    %v370 = vmul.f32 %v369, %v368
    %v371 = vmul.f32 %v370, %v369
    %v372 = vmul.f32 0.5, %v371
    %v373 = vsub.f32 1.5, %v372
    %v374 = vmul.f32 %v369, %v373
    %vm375 = vweird.f32 %v368
    %vm376 = vweird.f32 %v369
    %vm377 = vmor %vm375, %vm376
    %v378 = vsel %vm377, %v369, %v374
    %v379 = vmul.f32 %v356, %v378
    %v380 = vmul.f32 %v361, %v378
    %v381 = vsub.f32 %v379, %v380
    %v382 = vmax.f32 %v381, 0.0
    %383 = vst [vmem:[#allocation8] sm:$0xff] %v382
    // Predicated region
    $region26: #{tpu_custom_call.1} parent=1 // pred_check
      _
    $region27: #{tpu_custom_call.1} parent=1 // pred_check_branch
      %385 = sbr.rel (0) target = $region29
    $region28: #{tpu_custom_call.1} parent=1 // pred_region
      %387 = vsyncadd [#allocation4], 0
      %s389 = sshll.u32 [#allocation8], 4
      %s390 = int_to_ptr.vmem [resolvable:$true] %s389
      %s391 = sshll.u32 %s3, 4
      %s392 = int_to_ptr.hbm [resolvable:$true] %s391
      %394 = dma.vmem_to_hbm [thread:$0]  %s390, 128, %s392, [#allocation4]
    $region29: #{tpu_custom_call.1} parent=1 // pred_fallthru
      _
    // Predicated region
    $region30: #{tpu_custom_call.1} parent=1 // pred_check
      _
    $region31: #{tpu_custom_call.1} parent=1 // pred_check_branch
      %396 = sbr.rel (0) target = $region33
    $region32: #{tpu_custom_call.1} parent=1 // pred_region
      %398 = dma.done [#allocation4], 128
    $region33: #{tpu_custom_call.1} parent=1 // pred_fallthru
      _
    %399 = vsyncpa [#allocation3], 1
    %400 = vsyncpa [#allocation6], 1
    %401 = vsyncpa [#allocation4], 1

// kernel: tpu_custom_call.1
$region0: #{tpu_custom_call.1}
  #allocation0 [shape = 'u32[]', space=smem, size = 0x4, offset = 0x4, fixed_abs, tag = 'smem constant byte address 0x4 - core index']
  #allocation1 [shape = 'u32[72,128]{1,0:T(1,128)}', space=vmem, size = 0x9000, scoped, tag = 'internal scratch']
  %s0 = inlined_call_operand.hbm [shape: f32[8,128], index: 0, kind: input, shape index: {}]
  %s1 = inlined_call_operand.hbm [shape: bf16[3,128,128], index: 1, kind: input, shape index: {}]
  %s2 = inlined_call_operand.hbm [shape: f32[3,1,128], index: 2, kind: input, shape index: {}]
  %s3 = inlined_call_operand.hbm [shape: f32[8,128], index: 3, kind: output, shape index: {}]
  %s4 = sld [smem:[#allocation0]]
  $region34: #{tpu_custom_call.1} parent=0
    _
  %s6 = ssub.s32 1, %s4
  %s7 = scalar_select 0, %s6, %s4
  $region1: #{tpu_custom_call.1} parent=0
    #allocation2 [shape = 'u8[4096]{0}', space=vmem, size = 0x1000, scoped, tag = 'input window, operand 0, single buffered']
    #allocation3 [shape = 's32[1]{0}', space=sflag, size = 0x4, scoped, tag = 'scoped memory for tpu_custom_call.1']
    #allocation4 [shape = 's32[1]{0}', space=sflag, size = 0x4, scoped, tag = 'scoped memory for tpu_custom_call.1']
    #allocation5 [shape = 'u8[98304]{0}', space=vmem, size = 0x18000, scoped, tag = 'input window, operand 1, single buffered']
    #allocation6 [shape = 's32[1]{0}', space=sflag, size = 0x4, scoped, tag = 'scoped memory for tpu_custom_call.1']
    #allocation7 [shape = 'u8[1536]{0}', space=vmem, size = 0x800, scoped, tag = 'input window, operand 2, single buffered']
    #allocation8 [shape = 'u8[4096]{0}', space=vmem, size = 0x1000, scoped, tag = 'output window, operand 0, single buffered']
    %8 = vsyncpa [#allocation3], 0
    %9 = vsyncpa [#allocation6], 0
    %10 = vsyncpa [#allocation4], 0
    // Predicated region
    $region2: #{tpu_custom_call.1} parent=1 // pred_check
      _
    $region3: #{tpu_custom_call.1} parent=1 // pred_check_branch
      %12 = sbr.rel (0) target = $region5
    $region4: #{tpu_custom_call.1} parent=1 // pred_region
      %14 = vsyncadd [#allocation3], 0
      %s16 = sshll.u32 %s0, 4
      %s17 = int_to_ptr.hbm [resolvable:$true] %s16
      %s18 = sshll.u32 [#allocation2], 4
      %s19 = int_to_ptr.vmem [resolvable:$true] %s18
      %21 = dma.hbm_to_vmem [thread:$0]  %s17, 128, %s19, [#allocation3]
    $region5: #{tpu_custom_call.1} parent=1 // pred_fallthru
      _
    // Predicated region
    $region6: #{tpu_custom_call.1} parent=1 // pred_check
      _
    $region7: #{tpu_custom_call.1} parent=1 // pred_check_branch
      %23 = sbr.rel (0) target = $region9
    $region8: #{tpu_custom_call.1} parent=1 // pred_region
      %25 = vsyncadd [#allocation6], 0
      %s26 = sshll.u32 %s1, 4
      %s27 = int_to_ptr.hbm [resolvable:$true] %s26
      %s28 = sshll.u32 [#allocation5], 4
      %s29 = int_to_ptr.vmem [resolvable:$true] %s28
      %34 = dma.hbm_to_vmem [thread:$0]  %s27, 3072, %s29, [#allocation6], 64, 64, 4
    $region9: #{tpu_custom_call.1} parent=1 // pred_fallthru
      _
    // Predicated region
    $region10: #{tpu_custom_call.1} parent=1 // pred_check
      _
    $region11: #{tpu_custom_call.1} parent=1 // pred_check_branch
      %36 = sbr.rel (0) target = $region13
    $region12: #{tpu_custom_call.1} parent=1 // pred_region
      %38 = vsyncadd [#allocation6], 0
      %s39 = sshll.u32 %s2, 4
      %s40 = int_to_ptr.hbm [resolvable:$true] %s39
      %s41 = sshll.u32 [#allocation7], 4
      %s42 = int_to_ptr.vmem [resolvable:$true] %s41
      %47 = dma.hbm_to_vmem [thread:$0]  %s40, 48, %s42, [#allocation6], 16, 16, 1
    $region13: #{tpu_custom_call.1} parent=1 // pred_fallthru
      _
    // Predicated region
    $region14: #{tpu_custom_call.1} parent=1 // pred_check
      _
    $region15: #{tpu_custom_call.1} parent=1 // pred_check_branch
      %49 = sbr.rel (0) target = $region17
    $region16: #{tpu_custom_call.1} parent=1 // pred_region
      %51 = dma.done [#allocation3], 128
    $region17: #{tpu_custom_call.1} parent=1 // pred_fallthru
      _
    // Predicated region
    $region18: #{tpu_custom_call.1} parent=1 // pred_check
      _
    $region19: #{tpu_custom_call.1} parent=1 // pred_check_branch
      %53 = sbr.rel (0) target = $region21
    $region20: #{tpu_custom_call.1} parent=1 // pred_region
      %55 = dma.done [#allocation6], 3072
    $region21: #{tpu_custom_call.1} parent=1 // pred_fallthru
      _
    // Predicated region
    $region22: #{tpu_custom_call.1} parent=1 // pred_check
      _
    $region23: #{tpu_custom_call.1} parent=1 // pred_check_branch
      %57 = sbr.rel (0) target = $region25
    $region24: #{tpu_custom_call.1} parent=1 // pred_region
      %59 = dma.done [#allocation6], 48
    $region25: #{tpu_custom_call.1} parent=1 // pred_fallthru
      _
    %v60 = vld [vmem:[#allocation2] sm:$0xff]
    %v61 = vpack.c.bf16 %v60, %v60
    %v62 = vld [vmem:[#allocation5] sm:$0xf]
    %v63 = vld [vmem:[#allocation5 + $0x4] sm:$0xf]
    %v64 = vld [vmem:[#allocation5 + $0x8] sm:$0xf]
    %v65 = vld [vmem:[#allocation5 + $0xc] sm:$0xf]
    %v66 = vld [vmem:[#allocation5 + $0x10] sm:$0xf]
    %v67 = vld [vmem:[#allocation5 + $0x14] sm:$0xf]
    %v68 = vld [vmem:[#allocation5 + $0x18] sm:$0xf]
    %v69 = vld [vmem:[#allocation5 + $0x1c] sm:$0xf]
    %v70 = vld [vmem:[#allocation5 + $0x20] sm:$0xf]
    %v71 = vld [vmem:[#allocation5 + $0x24] sm:$0xf]
    %v72 = vld [vmem:[#allocation5 + $0x28] sm:$0xf]
    %v73 = vld [vmem:[#allocation5 + $0x2c] sm:$0xf]
    %v74 = vld [vmem:[#allocation5 + $0x30] sm:$0xf]
    %v75 = vld [vmem:[#allocation5 + $0x34] sm:$0xf]
    %v76 = vld [vmem:[#allocation5 + $0x38] sm:$0xf]
    %v77 = vld [vmem:[#allocation5 + $0x3c] sm:$0xf]
    %v78 = vld [vmem:[#allocation7] sm:$0x1]
    %v80 = vperm.slane %v78, 0
    %v98 = vunpack.c.l.b16 %v62
    %v99 = vunpack.c.l.b16 %v63
    %v100 = vunpack.c.l.b16 %v64
    %v101 = vunpack.c.l.b16 %v65
    %v102 = vunpack.c.l.b16 %v66
    %v103 = vunpack.c.l.b16 %v67
    %v104 = vunpack.c.l.b16 %v68
    %v105 = vunpack.c.l.b16 %v69
    %v106 = vunpack.c.l.b16 %v70
    %v107 = vunpack.c.l.b16 %v71
    %v108 = vunpack.c.l.b16 %v72
    %v109 = vunpack.c.l.b16 %v73
    %v110 = vunpack.c.l.b16 %v74
    %v111 = vunpack.c.l.b16 %v75
    %v112 = vunpack.c.l.b16 %v76
    %v113 = vunpack.c.l.b16 %v77
    %v114 = vpack.c.b16 %v99, %v98
    %v115 = vpack.c.b16 %v101, %v100
    %v116 = vpack.c.b16 %v103, %v102
    %v117 = vpack.c.b16 %v105, %v104
    %v118 = vpack.c.b16 %v107, %v106
    %v119 = vpack.c.b16 %v109, %v108
    %v120 = vpack.c.b16 %v111, %v110
    %v121 = vpack.c.b16 %v113, %v112
    %130 = vmatpush.bf16.msra.mxu0 %v121
    %131 = vmatpush.bf16.msra.mxu0 %v120
    %132 = vmatpush.bf16.msra.mxu0 %v119
    %133 = vmatpush.bf16.msra.mxu0 %v118
    %134 = vmatpush.bf16.msra.mxu0 %v117
    %135 = vmatpush.bf16.msra.mxu0 %v116
    %136 = vmatpush.bf16.msra.mxu0 %v115
    %137 = vmatpush.bf16.msra.mxu0 %v114
    %138 = vmatmul.bf16.gmra.mxu0 %v61
    %v139 = vpop.f32.mrf.mxu0
    %v140 = vadd.f32 %v80, %v139
    %v141 = vpop.f32.mrf.mxu0
    %142 = vdwg.mxu0
    %143 = vadd.xlane.f32.xlu0 %v140
    %v144 = vpop.xlane.xlu0 %143
    %v145 = vmul.f32 %v144, 0.0078125
    %v146 = vmul.f32 %v140, %v140
    %147 = vadd.xlane.f32.xlu0 %v146
    %v148 = vpop.xlane.xlu0 %147
    %v149 = vmul.f32 %v148, 0.0078125
    %v150 = vmul.f32 %v145, %v145
    %v151 = vsub.f32 %v149, %v150
    %v152 = vadd.f32 %v151, 1e-05
    %v153 = vrsqrt.pop %v152
    %v154 = vmul.f32 %v153, %v152
    %v155 = vmul.f32 %v154, %v153
    %v156 = vmul.f32 0.5, %v155
    %v157 = vsub.f32 1.5, %v156
    %v158 = vmul.f32 %v153, %v157
    %vm159 = vweird.f32 %v152
    %vm160 = vweird.f32 %v153
    %vm161 = vmor %vm159, %vm160
    %v162 = vsel %vm161, %v153, %v158
    %v163 = vmul.f32 %v140, %v162
    %v164 = vmul.f32 %v145, %v162
    %v165 = vsub.f32 %v163, %v164
    %v166 = vmax.f32 %v165, 0.0
    %v167 = vpack.c.bf16 %v166, %v166
    %s168 = scalar_lea.vmem [#allocation5], 64
    %v169 = vld [vmem:[%s168] sm:$0xf]
    %v170 = vld [vmem:[%s168 + $0x4] sm:$0xf]
    %v171 = vld [vmem:[%s168 + $0x8] sm:$0xf]
    %v172 = vld [vmem:[%s168 + $0xc] sm:$0xf]
    %v173 = vld [vmem:[%s168 + $0x10] sm:$0xf]
    %v174 = vld [vmem:[%s168 + $0x14] sm:$0xf]
    %v175 = vld [vmem:[%s168 + $0x18] sm:$0xf]
    %v176 = vld [vmem:[%s168 + $0x1c] sm:$0xf]
    %v177 = vld [vmem:[%s168 + $0x20] sm:$0xf]
    %v178 = vld [vmem:[%s168 + $0x24] sm:$0xf]
    %v179 = vld [vmem:[%s168 + $0x28] sm:$0xf]
    %v180 = vld [vmem:[%s168 + $0x2c] sm:$0xf]
    %v181 = vld [vmem:[%s168 + $0x30] sm:$0xf]
    %v182 = vld [vmem:[%s168 + $0x34] sm:$0xf]
    %v183 = vld [vmem:[%s168 + $0x38] sm:$0xf]
    %v184 = vld [vmem:[%s168 + $0x3c] sm:$0xf]
    %s185 = scalar_lea.vmem [#allocation7], 1
    %v186 = vld [vmem:[%s185] sm:$0x1]
    %v188 = vperm.slane %v186, 0
    %v206 = vunpack.c.l.b16 %v169
    %v207 = vunpack.c.l.b16 %v170
    %v208 = vunpack.c.l.b16 %v171
    %v209 = vunpack.c.l.b16 %v172
    %v210 = vunpack.c.l.b16 %v173
    %v211 = vunpack.c.l.b16 %v174
    %v212 = vunpack.c.l.b16 %v175
    %v213 = vunpack.c.l.b16 %v176
    %v214 = vunpack.c.l.b16 %v177
    %v215 = vunpack.c.l.b16 %v178
    %v216 = vunpack.c.l.b16 %v179
    %v217 = vunpack.c.l.b16 %v180
    %v218 = vunpack.c.l.b16 %v181
    %v219 = vunpack.c.l.b16 %v182
    %v220 = vunpack.c.l.b16 %v183
    %v221 = vunpack.c.l.b16 %v184
    %v222 = vpack.c.b16 %v207, %v206
    %v223 = vpack.c.b16 %v209, %v208
    %v224 = vpack.c.b16 %v211, %v210
    %v225 = vpack.c.b16 %v213, %v212
    %v226 = vpack.c.b16 %v215, %v214
    %v227 = vpack.c.b16 %v217, %v216
    %v228 = vpack.c.b16 %v219, %v218
    %v229 = vpack.c.b16 %v221, %v220
    %238 = vmatpush.bf16.msra.mxu0 %v229
    %239 = vmatpush.bf16.msra.mxu0 %v228
    %240 = vmatpush.bf16.msra.mxu0 %v227
    %241 = vmatpush.bf16.msra.mxu0 %v226
    %242 = vmatpush.bf16.msra.mxu0 %v225
    %243 = vmatpush.bf16.msra.mxu0 %v224
    %244 = vmatpush.bf16.msra.mxu0 %v223
    %245 = vmatpush.bf16.msra.mxu0 %v222
    %246 = vmatmul.bf16.gmra.mxu0 %v167
    %v247 = vpop.f32.mrf.mxu0
    %v248 = vadd.f32 %v188, %v247
    %v249 = vpop.f32.mrf.mxu0
    %250 = vdwg.mxu0
    %251 = vadd.xlane.f32.xlu0 %v248
    %v252 = vpop.xlane.xlu0 %251
    %v253 = vmul.f32 %v252, 0.0078125
    %v254 = vmul.f32 %v248, %v248
    %255 = vadd.xlane.f32.xlu0 %v254
    %v256 = vpop.xlane.xlu0 %255
    %v257 = vmul.f32 %v256, 0.0078125
    %v258 = vmul.f32 %v253, %v253
    %v259 = vsub.f32 %v257, %v258
    %v260 = vadd.f32 %v259, 1e-05
    %v261 = vrsqrt.pop %v260
    %v262 = vmul.f32 %v261, %v260
    %v263 = vmul.f32 %v262, %v261
    %v264 = vmul.f32 0.5, %v263
    %v265 = vsub.f32 1.5, %v264
    %v266 = vmul.f32 %v261, %v265
    %vm267 = vweird.f32 %v260
    %vm268 = vweird.f32 %v261
    %vm269 = vmor %vm267, %vm268
    %v270 = vsel %vm269, %v261, %v266
    %v271 = vmul.f32 %v248, %v270
    %v272 = vmul.f32 %v253, %v270
    %v273 = vsub.f32 %v271, %v272
    %v274 = vmax.f32 %v273, 0.0
    %v275 = vpack.c.bf16 %v274, %v274
    %s276 = scalar_lea.vmem [#allocation5], 128
    %v277 = vld [vmem:[%s276] sm:$0xf]
    %v278 = vld [vmem:[%s276 + $0x4] sm:$0xf]
    %v279 = vld [vmem:[%s276 + $0x8] sm:$0xf]
    %v280 = vld [vmem:[%s276 + $0xc] sm:$0xf]
    %v281 = vld [vmem:[%s276 + $0x10] sm:$0xf]
    %v282 = vld [vmem:[%s276 + $0x14] sm:$0xf]
    %v283 = vld [vmem:[%s276 + $0x18] sm:$0xf]
    %v284 = vld [vmem:[%s276 + $0x1c] sm:$0xf]
    %v285 = vld [vmem:[%s276 + $0x20] sm:$0xf]
    %v286 = vld [vmem:[%s276 + $0x24] sm:$0xf]
    %v287 = vld [vmem:[%s276 + $0x28] sm:$0xf]
    %v288 = vld [vmem:[%s276 + $0x2c] sm:$0xf]
    %v289 = vld [vmem:[%s276 + $0x30] sm:$0xf]
    %v290 = vld [vmem:[%s276 + $0x34] sm:$0xf]
    %v291 = vld [vmem:[%s276 + $0x38] sm:$0xf]
    %v292 = vld [vmem:[%s276 + $0x3c] sm:$0xf]
    %s293 = scalar_lea.vmem [#allocation7], 2
    %v294 = vld [vmem:[%s293] sm:$0x1]
    %v296 = vperm.slane %v294, 0
    %v314 = vunpack.c.l.b16 %v277
    %v315 = vunpack.c.l.b16 %v278
    %v316 = vunpack.c.l.b16 %v279
    %v317 = vunpack.c.l.b16 %v280
    %v318 = vunpack.c.l.b16 %v281
    %v319 = vunpack.c.l.b16 %v282
    %v320 = vunpack.c.l.b16 %v283
    %v321 = vunpack.c.l.b16 %v284
    %v322 = vunpack.c.l.b16 %v285
    %v323 = vunpack.c.l.b16 %v286
    %v324 = vunpack.c.l.b16 %v287
    %v325 = vunpack.c.l.b16 %v288
    %v326 = vunpack.c.l.b16 %v289
    %v327 = vunpack.c.l.b16 %v290
    %v328 = vunpack.c.l.b16 %v291
    %v329 = vunpack.c.l.b16 %v292
    %v330 = vpack.c.b16 %v315, %v314
    %v331 = vpack.c.b16 %v317, %v316
    %v332 = vpack.c.b16 %v319, %v318
    %v333 = vpack.c.b16 %v321, %v320
    %v334 = vpack.c.b16 %v323, %v322
    %v335 = vpack.c.b16 %v325, %v324
    %v336 = vpack.c.b16 %v327, %v326
    %v337 = vpack.c.b16 %v329, %v328
    %346 = vmatpush.bf16.msra.mxu0 %v337
    %347 = vmatpush.bf16.msra.mxu0 %v336
    %348 = vmatpush.bf16.msra.mxu0 %v335
    %349 = vmatpush.bf16.msra.mxu0 %v334
    %350 = vmatpush.bf16.msra.mxu0 %v333
    %351 = vmatpush.bf16.msra.mxu0 %v332
    %352 = vmatpush.bf16.msra.mxu0 %v331
    %353 = vmatpush.bf16.msra.mxu0 %v330
    %354 = vmatmul.bf16.gmra.mxu0 %v275
    %v355 = vpop.f32.mrf.mxu0
    %v356 = vadd.f32 %v296, %v355
    %v357 = vpop.f32.mrf.mxu0
    %358 = vdwg.mxu0
    %359 = vadd.xlane.f32.xlu0 %v356
    %v360 = vpop.xlane.xlu0 %359
    %v361 = vmul.f32 %v360, 0.0078125
    %v362 = vmul.f32 %v356, %v356
    %363 = vadd.xlane.f32.xlu0 %v362
    %v364 = vpop.xlane.xlu0 %363
    %v365 = vmul.f32 %v364, 0.0078125
    %v366 = vmul.f32 %v361, %v361
    %v367 = vsub.f32 %v365, %v366
    %v368 = vadd.f32 %v367, 1e-05
    %v369 = vrsqrt.pop %v368
    %v370 = vmul.f32 %v369, %v368
    %v371 = vmul.f32 %v370, %v369
    %v372 = vmul.f32 0.5, %v371
    %v373 = vsub.f32 1.5, %v372
    %v374 = vmul.f32 %v369, %v373
    %vm375 = vweird.f32 %v368
    %vm376 = vweird.f32 %v369
    %vm377 = vmor %vm375, %vm376
    %v378 = vsel %vm377, %v369, %v374
    %v379 = vmul.f32 %v356, %v378
    %v380 = vmul.f32 %v361, %v378
    %v381 = vsub.f32 %v379, %v380
    %v382 = vmax.f32 %v381, 0.0
    %383 = vst [vmem:[#allocation8] sm:$0xff] %v382
    // Predicated region
    $region26: #{tpu_custom_call.1} parent=1 // pred_check
      _
    $region27: #{tpu_custom_call.1} parent=1 // pred_check_branch
      %385 = sbr.rel (0) target = $region29
    $region28: #{tpu_custom_call.1} parent=1 // pred_region
      %387 = vsyncadd [#allocation4], 0
      %s389 = sshll.u32 [#allocation8], 4
      %s390 = int_to_ptr.vmem [resolvable:$true] %s389
      %s391 = sshll.u32 %s3, 4
      %s392 = int_to_ptr.hbm [resolvable:$true] %s391
      %394 = dma.vmem_to_hbm [thread:$0]  %s390, 128, %s392, [#allocation4]
    $region29: #{tpu_custom_call.1} parent=1 // pred_fallthru
      _
    // Predicated region
    $region30: #{tpu_custom_call.1} parent=1 // pred_check
      _
    $region31: #{tpu_custom_call.1} parent=1 // pred_check_branch
      %396 = sbr.rel (0) target = $region33
    $region32: #{tpu_custom_call.1} parent=1 // pred_region
      %398 = dma.done [#allocation4], 128
    $region33: #{tpu_custom_call.1} parent=1 // pred_fallthru
      _
    %399 = vsyncpa [#allocation3], 1
    %400 = vsyncpa [#allocation6], 1
    %401 = vsyncpa [#allocation4], 1

</llo_original>
